<compile_context>
chip_gen: v7x
topology: tpu7x:2x2x1
jax: 0.10.0
libtpu: 0.0.40
codegen_flags: <defaults>
</compile_context>

<pallas_src>
import math
import functools

import jax
import jax.numpy as jnp
import numpy as np
from jax.experimental import pallas as pl
from jax.experimental.pallas import tpu as pltpu


def _round_up(v, m):
    return ((v + m - 1) // m) * m


# ----------------------------- in-kernel math ------------------------------

def _erf(x):
    # Abramowitz & Stegun 7.1.26 rational approximation (max abs err ~1.5e-7).
    # Exact divide: at this size the EUP slot is idle, so the exact path is
    # free and tightens GELU accuracy vs. the old approx-reciprocal.
    a1, a2, a3, a4, a5 = (0.254829592, -0.284496736, 1.421413741,
                          -1.453152027, 1.061405429)
    p = 0.3275911
    ax = jnp.abs(x)
    t = 1.0 / (1.0 + p * ax)
    poly = ((((a5 * t + a4) * t + a3) * t + a2) * t + a1) * t
    y = 1.0 - poly * jnp.exp(-ax * ax)
    return jnp.where(x >= 0.0, y, -y)


def _gelu_exact(x):
    # exact (erf-based) GELU, matching torch.nn.GELU() default
    return 0.5 * x * (1.0 + _erf(x * (1.0 / math.sqrt(2.0))))


# ------------------------------- fused kernel -------------------------------

def fused_kernel(x_ref, dw_ref, wcat_ref, gb_ref, pv_ref, o_ref,
                 *, eps, s_total):
    """Linear -> BatchNorm1d(batch stats) -> GELU -> [n heads | disc] fused.

    gb_ref : (2, L)   row0 = gamma, row1 = beta
    pv_ref : (3, PAD) row0 = concatenated head/disc biases (zero-padded),
                      row1 = disc_w2 placed at lanes [s_total, s_total+L),
                      row2 = disc_b2 broadcast across lanes
    """
    B = x_ref.shape[0]

    # ---- trunk: Linear (dense bias dropped: cancels exactly in BN mean
    # subtraction) + BatchNorm1d (training-mode, biased variance) + GELU.
    h = jnp.dot(x_ref[...], dw_ref[...], preferred_element_type=jnp.float32)
    inv_b = 1.0 / B                                    # compile-time constant
    mean = jnp.sum(h, axis=0, keepdims=True) * inv_b   # one pass over h
    var = jnp.maximum(
        jnp.sum(h * h, axis=0, keepdims=True) * inv_b - mean * mean, 0.0)
    scale = gb_ref[0:1, :] * jax.lax.rsqrt(var + eps)
    shift = gb_ref[1:2, :] - mean * scale
    h = _gelu_exact(h * scale + shift)                 # single FMA + GELU

    # ---- all n heads + disc first layer: ONE lane-dense MXU matmul
    y = jnp.dot(h, wcat_ref[...],
                preferred_element_type=jnp.float32) + pv_ref[0:1, :]

    # ---- discriminator tail: GELU over the full slab (same vregs -> free),
    # VPU multiply by the zero-padded w2 row, XLU lane-sum, sigmoid.
    # No unaligned lane slice, no N=1 MXU matmul.
    g = _gelu_exact(y)
    d = jax.nn.sigmoid(
        jnp.sum(g * pv_ref[1:2, :], axis=-1, keepdims=True) + pv_ref[2, 0])

    # ---- one unmasked lane-dense store: heads in lanes [0, s_total),
    # disc output at lane s_total; lanes > s_total are never read.
    col = jax.lax.broadcasted_iota(jnp.int32, o_ref.shape, 1)
    o_ref[...] = jnp.where(col == s_total, d, y)


# ------------------------------- module ------------------------------------

class DecoderDisc:
    def __init__(self, latent_dim, n, shape, weight, key):
        self.latent_dim = latent_dim
        self.n = n
        self.shape = list(shape)
        self.weight = weight  # unused in forward (mirrors the PyTorch module)

        ks = jax.random.split(key, 4 + 2 * n + 4)
        L = latent_dim
        sc = 0.1
        # denses[0]: Linear(L, L) (weights stored transposed: (in, out))
        self.dense_w = sc * jax.random.normal(ks[0], (L, L), jnp.float32)
        self.dense_b = sc * jax.random.normal(ks[1], (1, L), jnp.float32)
        # denses[1]: BatchNorm1d affine params (eps=0.001, training-mode stats)
        self.bn_gamma = 1.0 + sc * jax.random.normal(ks[2], (1, L), jnp.float32)
        self.bn_beta = sc * jax.random.normal(ks[3], (1, L), jnp.float32)
        # decode[i]: Linear(L, shape[i])
        self.head_w, self.head_b = [], []
        for i in range(n):
            self.head_w.append(sc * jax.random.normal(ks[4 + 2 * i],
                                                      (L, self.shape[i]),
                                                      jnp.float32))
            self.head_b.append(sc * jax.random.normal(ks[5 + 2 * i],
                                                      (1, self.shape[i]),
                                                      jnp.float32))
        # disc: Linear(L, L) -> GELU -> Linear(L, 1) -> Sigmoid
        o = 4 + 2 * n
        self.disc_w1 = sc * jax.random.normal(ks[o + 0], (L, L), jnp.float32)
        self.disc_b1 = sc * jax.random.normal(ks[o + 1], (1, L), jnp.float32)
        self.disc_w2 = sc * jax.random.normal(ks[o + 2], (L, 1), jnp.float32)
        self.disc_b2 = sc * jax.random.normal(ks[o + 3], (1, 1), jnp.float32)

        # ---- packed / lane-padded kernel parameters -------------------------
        # Fused weight: [head_0 | ... | head_{n-1} | disc_w1 | 0] -> (L, PAD).
        self.s_total = sum(self.shape)
        raw = self.s_total + L
        self.pad = _round_up(raw, 128)
        w_cat = jnp.concatenate(self.head_w + [self.disc_w1], axis=1)
        b_cat = jnp.concatenate(self.head_b + [self.disc_b1], axis=1)
        self.w_cat = jnp.pad(w_cat, ((0, 0), (0, self.pad - raw)))
        b_cat = jnp.pad(b_cat, ((0, 0), (0, self.pad - raw)))

        # gb slab (2, L): [gamma; beta].  (dense bias intentionally NOT passed
        # to the kernel: it cancels in the BatchNorm mean subtraction.)
        self.gb = jnp.concatenate([self.bn_gamma, self.bn_beta], axis=0)

        # pvec slab (3, PAD): [b_cat; disc_w2 row at lanes [S, S+L); disc_b2].
        w2_row = jnp.zeros((1, self.pad), jnp.float32)
        w2_row = w2_row.at[0, self.s_total:self.s_total + L].set(
            self.disc_w2[:, 0])
        db2_row = jnp.broadcast_to(self.disc_b2, (1, self.pad))
        self.pvec = jnp.concatenate([b_cat, w2_row, db2_row], axis=0)

    # ---- Pallas forward: ONE fused pallas_call ----
    def __call__(self, x):
        B, L = x.shape
        assert L == self.latent_dim
        S, PAD = self.s_total, self.pad

        flops = 2 * B * L * (L + PAD) + 40 * B * (L + PAD) + 10 * L
        transcendentals = B * (2 * L + 2 * PAD + 1) + L
        bytes_accessed = 4 * (B * L + L * L + L * PAD + 2 * L + 3 * PAD
                              + B * PAD)

        slab = pl.pallas_call(
            functools.partial(fused_kernel, eps=1e-3, s_total=S),
            out_shape=jax.ShapeDtypeStruct((B, PAD), jnp.float32),
            in_specs=[pl.BlockSpec(memory_space=pltpu.MemorySpace.VMEM)] * 5,
            out_specs=pl.BlockSpec(memory_space=pltpu.MemorySpace.VMEM),
            cost_estimate=pl.CostEstimate(flops=flops,
                                          transcendentals=transcendentals,
                                          bytes_accessed=bytes_accessed),
        )(x, self.dense_w, self.w_cat, self.gb, self.pvec)

        # Split the lane-dense slab into the per-head tensors (cheap slices).
        outs = []
        off = 0
        for i in range(self.n):
            outs.append(slab[:, off:off + self.shape[i]])
            off += self.shape[i]
        outs.append(slab[:, S:S + 1])          # discriminator output (B, 1)
        return outs

    # ---- pure-JAX reference (same semantics as the PyTorch module) ----
    def reference(self, x):
        hp = jax.lax.Precision.HIGHEST

        def gelu(t):
            return 0.5 * t * (1.0 + jax.scipy.special.erf(t / math.sqrt(2.0)))

        h = jnp.dot(x, self.dense_w, precision=hp) + self.dense_b
        mean = jnp.mean(h, axis=0, keepdims=True)
        var = jnp.mean((h - mean) ** 2, axis=0, keepdims=True)
        h = self.bn_gamma * (h - mean) / jnp.sqrt(var + 1e-3) + self.bn_beta
        h = gelu(h)

        outs = [jnp.dot(h, self.head_w[i], precision=hp) + self.head_b[i]
                for i in range(self.n)]
        t = gelu(jnp.dot(h, self.disc_w1, precision=hp) + self.disc_b1)
        t = jnp.dot(t, self.disc_w2, precision=hp) + self.disc_b2
        outs.append(jax.nn.sigmoid(t))
        return outs


# --------------------------------- main -------------------------------------

if __name__ == "__main__":
    latent_dim, n, shape = 32, 3, [16, 24, 8]
    B = 8

    key = jax.random.PRNGKey(0)
    kx, kp = jax.random.split(key)
    model = DecoderDisc(latent_dim, n, shape, weight=1.0, key=kp)
    x = jax.random.normal(kx, (B, latent_dim), dtype=jnp.float32)

    outs = model(x)
    outs = jax.block_until_ready(outs)

    refs = model.reference(x)
    assert len(outs) == n + 1
    for o, r in zip(outs, refs):
        assert o.shape == r.shape, (o.shape, r.shape)
        # Tolerance tightened vs. the previous approx-reciprocal version;
        # remaining gap is the A&S erf approximation + one-pass batch variance.
        np.testing.assert_allclose(np.asarray(o), np.asarray(r),
                                   rtol=1e-3, atol=5e-4)

    print("KERNEL_OK")
</pallas_src>

<mosaic_0001>
module attributes {stable_mosaic.version = 11 : i64} {
  func.func @fused_kernel(%arg0: memref<8x32xf32, #tpu.memory_space<vmem>>, %arg1: memref<32x32xf32, #tpu.memory_space<vmem>>, %arg2: memref<32x128xf32, #tpu.memory_space<vmem>>, %arg3: memref<2x32xf32, #tpu.memory_space<vmem>>, %arg4: memref<3x128xf32, #tpu.memory_space<vmem>>, %arg5: memref<8x128xf32, #tpu.memory_space<vmem>>) attributes {dimension_semantics = [], scalar_prefetch = 0 : i64, scratch_operands = 0 : i64, tpu.core_type = #tpu.core_type<tc>} {
    %c0 = arith.constant 0 : index
    %c0_0 = arith.constant 0 : index
    %0 = vector.load %arg0[%c0, %c0_0] : memref<8x32xf32, #tpu.memory_space<vmem>>, vector<8x32xf32>
    %c0_1 = arith.constant 0 : index
    %c0_2 = arith.constant 0 : index
    %1 = vector.load %arg1[%c0_1, %c0_2] : memref<32x32xf32, #tpu.memory_space<vmem>>, vector<32x32xf32>
    %cst = arith.constant dense<0.000000e+00> : vector<8x32xf32>
    %2 = tpu.matmul %0, %1, %cst {dimension_numbers = #tpu.dot_dimension_numbers<[1], [0], [0], [1], [0, 0, 1, 1], [], []>} : vector<8x32xf32>, vector<32x32xf32>, vector<8x32xf32> -> vector<8x32xf32>
    %cst_3 = arith.constant dense<0.000000e+00> : vector<32xf32>
    %3 = vector.multi_reduction <add>, %2, %cst_3 [0] : vector<8x32xf32> to vector<32xf32>
    %4 = vector.shape_cast %3 : vector<32xf32> to vector<1x32xf32>
    %cst_4 = arith.constant 1.250000e-01 : f32
    %5 = vector.broadcast %cst_4 : f32 to vector<1x32xf32>
    %6 = arith.mulf %4, %5 : vector<1x32xf32>
    %7 = arith.mulf %2, %2 : vector<8x32xf32>
    %cst_5 = arith.constant dense<0.000000e+00> : vector<32xf32>
    %8 = vector.multi_reduction <add>, %7, %cst_5 [0] : vector<8x32xf32> to vector<32xf32>
    %9 = vector.shape_cast %8 : vector<32xf32> to vector<1x32xf32>
    %cst_6 = arith.constant 1.250000e-01 : f32
    %10 = vector.broadcast %cst_6 : f32 to vector<1x32xf32>
    %11 = arith.mulf %9, %10 : vector<1x32xf32>
    %12 = arith.mulf %6, %6 : vector<1x32xf32>
    %13 = arith.subf %11, %12 : vector<1x32xf32>
    %cst_7 = arith.constant 0.000000e+00 : f32
    %14 = vector.broadcast %cst_7 : f32 to vector<1x32xf32>
    %15 = arith.maximumf %13, %14 : vector<1x32xf32>
    %c0_8 = arith.constant 0 : index
    %c0_9 = arith.constant 0 : index
    %16 = vector.load %arg3[%c0_8, %c0_9] : memref<2x32xf32, #tpu.memory_space<vmem>>, vector<1x32xf32>
    %cst_10 = arith.constant 1.000000e-03 : f32
    %17 = vector.broadcast %cst_10 : f32 to vector<1x32xf32>
    %18 = arith.addf %15, %17 : vector<1x32xf32>
    %19 = math.rsqrt %18 : vector<1x32xf32>
    %20 = arith.mulf %16, %19 : vector<1x32xf32>
    %c1 = arith.constant 1 : index
    %c0_11 = arith.constant 0 : index
    %21 = vector.load %arg3[%c1, %c0_11] : memref<2x32xf32, #tpu.memory_space<vmem>>, vector<1x32xf32>
    %22 = arith.mulf %6, %20 : vector<1x32xf32>
    %23 = arith.subf %21, %22 : vector<1x32xf32>
    %24 = vector.broadcast %20 : vector<1x32xf32> to vector<8x32xf32>
    %25 = arith.mulf %2, %24 : vector<8x32xf32>
    %26 = vector.broadcast %23 : vector<1x32xf32> to vector<8x32xf32>
    %27 = arith.addf %25, %26 : vector<8x32xf32>
    %cst_12 = arith.constant 5.000000e-01 : f32
    %28 = vector.broadcast %cst_12 : f32 to vector<8x32xf32>
    %29 = arith.mulf %28, %27 : vector<8x32xf32>
    %cst_13 = arith.constant 0.707106769 : f32
    %30 = vector.broadcast %cst_13 : f32 to vector<8x32xf32>
    %31 = arith.mulf %27, %30 : vector<8x32xf32>
    %32 = math.absf %31 : vector<8x32xf32>
    %cst_14 = arith.constant 0.327591091 : f32
    %33 = vector.broadcast %cst_14 : f32 to vector<8x32xf32>
    %34 = arith.mulf %33, %32 : vector<8x32xf32>
    %cst_15 = arith.constant 1.000000e+00 : f32
    %35 = vector.broadcast %cst_15 : f32 to vector<8x32xf32>
    %36 = arith.addf %35, %34 : vector<8x32xf32>
    %cst_16 = arith.constant 1.000000e+00 : f32
    %37 = vector.broadcast %cst_16 : f32 to vector<8x32xf32>
    %38 = arith.divf %37, %36 : vector<8x32xf32>
    %cst_17 = arith.constant 1.06140542 : f32
    %39 = vector.broadcast %cst_17 : f32 to vector<8x32xf32>
    %40 = arith.mulf %39, %38 : vector<8x32xf32>
    %cst_18 = arith.constant -1.45315206 : f32
    %41 = vector.broadcast %cst_18 : f32 to vector<8x32xf32>
    %42 = arith.addf %40, %41 : vector<8x32xf32>
    %43 = arith.mulf %42, %38 : vector<8x32xf32>
    %cst_19 = arith.constant 1.42141378 : f32
    %44 = vector.broadcast %cst_19 : f32 to vector<8x32xf32>
    %45 = arith.addf %43, %44 : vector<8x32xf32>
    %46 = arith.mulf %45, %38 : vector<8x32xf32>
    %cst_20 = arith.constant -0.284496725 : f32
    %47 = vector.broadcast %cst_20 : f32 to vector<8x32xf32>
    %48 = arith.addf %46, %47 : vector<8x32xf32>
    %49 = arith.mulf %48, %38 : vector<8x32xf32>
    %cst_21 = arith.constant 0.254829586 : f32
    %50 = vector.broadcast %cst_21 : f32 to vector<8x32xf32>
    %51 = arith.addf %49, %50 : vector<8x32xf32>
    %52 = arith.mulf %51, %38 : vector<8x32xf32>
    %cst_22 = arith.constant 0.000000e+00 : f32
    %53 = vector.broadcast %cst_22 : f32 to vector<8x32xf32>
    %54 = arith.subf %53, %32 : vector<8x32xf32>
    %55 = arith.mulf %54, %32 : vector<8x32xf32>
    %56 = math.exp %55 : vector<8x32xf32>
    %57 = arith.mulf %52, %56 : vector<8x32xf32>
    %cst_23 = arith.constant 1.000000e+00 : f32
    %58 = vector.broadcast %cst_23 : f32 to vector<8x32xf32>
    %59 = arith.subf %58, %57 : vector<8x32xf32>
    %cst_24 = arith.constant 0.000000e+00 : f32
    %60 = vector.broadcast %cst_24 : f32 to vector<8x32xf32>
    %61 = arith.cmpf oge, %31, %60 : vector<8x32xf32>
    %cst_25 = arith.constant 0.000000e+00 : f32
    %62 = vector.broadcast %cst_25 : f32 to vector<8x32xf32>
    %63 = arith.subf %62, %59 : vector<8x32xf32>
    %64 = arith.select %61, %59, %63 : vector<8x32xi1>, vector<8x32xf32>
    %cst_26 = arith.constant 1.000000e+00 : f32
    %65 = vector.broadcast %cst_26 : f32 to vector<8x32xf32>
    %66 = arith.addf %65, %64 : vector<8x32xf32>
    %67 = arith.mulf %29, %66 : vector<8x32xf32>
    %c0_27 = arith.constant 0 : index
    %c0_28 = arith.constant 0 : index
    %68 = vector.load %arg2[%c0_27, %c0_28] : memref<32x128xf32, #tpu.memory_space<vmem>>, vector<32x128xf32>
    %cst_29 = arith.constant dense<0.000000e+00> : vector<8x128xf32>
    %69 = tpu.matmul %67, %68, %cst_29 {dimension_numbers = #tpu.dot_dimension_numbers<[1], [0], [0], [1], [0, 0, 1, 1], [], []>} : vector<8x32xf32>, vector<32x128xf32>, vector<8x128xf32> -> vector<8x128xf32>
    %c0_30 = arith.constant 0 : index
    %c0_31 = arith.constant 0 : index
    %70 = vector.load %arg4[%c0_30, %c0_31] : memref<3x128xf32, #tpu.memory_space<vmem>>, vector<1x128xf32>
    %71 = vector.broadcast %70 : vector<1x128xf32> to vector<8x128xf32>
    %72 = arith.addf %69, %71 : vector<8x128xf32>
    %cst_32 = arith.constant 5.000000e-01 : f32
    %73 = vector.broadcast %cst_32 : f32 to vector<8x128xf32>
    %74 = arith.mulf %73, %72 : vector<8x128xf32>
    %cst_33 = arith.constant 0.707106769 : f32
    %75 = vector.broadcast %cst_33 : f32 to vector<8x128xf32>
    %76 = arith.mulf %72, %75 : vector<8x128xf32>
    %77 = math.absf %76 : vector<8x128xf32>
    %cst_34 = arith.constant 0.327591091 : f32
    %78 = vector.broadcast %cst_34 : f32 to vector<8x128xf32>
    %79 = arith.mulf %78, %77 : vector<8x128xf32>
    %cst_35 = arith.constant 1.000000e+00 : f32
    %80 = vector.broadcast %cst_35 : f32 to vector<8x128xf32>
    %81 = arith.addf %80, %79 : vector<8x128xf32>
    %cst_36 = arith.constant 1.000000e+00 : f32
    %82 = vector.broadcast %cst_36 : f32 to vector<8x128xf32>
    %83 = arith.divf %82, %81 : vector<8x128xf32>
    %cst_37 = arith.constant 1.06140542 : f32
    %84 = vector.broadcast %cst_37 : f32 to vector<8x128xf32>
    %85 = arith.mulf %84, %83 : vector<8x128xf32>
    %cst_38 = arith.constant -1.45315206 : f32
    %86 = vector.broadcast %cst_38 : f32 to vector<8x128xf32>
    %87 = arith.addf %85, %86 : vector<8x128xf32>
    %88 = arith.mulf %87, %83 : vector<8x128xf32>
    %cst_39 = arith.constant 1.42141378 : f32
    %89 = vector.broadcast %cst_39 : f32 to vector<8x128xf32>
    %90 = arith.addf %88, %89 : vector<8x128xf32>
    %91 = arith.mulf %90, %83 : vector<8x128xf32>
    %cst_40 = arith.constant -0.284496725 : f32
    %92 = vector.broadcast %cst_40 : f32 to vector<8x128xf32>
    %93 = arith.addf %91, %92 : vector<8x128xf32>
    %94 = arith.mulf %93, %83 : vector<8x128xf32>
    %cst_41 = arith.constant 0.254829586 : f32
    %95 = vector.broadcast %cst_41 : f32 to vector<8x128xf32>
    %96 = arith.addf %94, %95 : vector<8x128xf32>
    %97 = arith.mulf %96, %83 : vector<8x128xf32>
    %cst_42 = arith.constant 0.000000e+00 : f32
    %98 = vector.broadcast %cst_42 : f32 to vector<8x128xf32>
    %99 = arith.subf %98, %77 : vector<8x128xf32>
    %100 = arith.mulf %99, %77 : vector<8x128xf32>
    %101 = math.exp %100 : vector<8x128xf32>
    %102 = arith.mulf %97, %101 : vector<8x128xf32>
    %cst_43 = arith.constant 1.000000e+00 : f32
    %103 = vector.broadcast %cst_43 : f32 to vector<8x128xf32>
    %104 = arith.subf %103, %102 : vector<8x128xf32>
    %cst_44 = arith.constant 0.000000e+00 : f32
    %105 = vector.broadcast %cst_44 : f32 to vector<8x128xf32>
    %106 = arith.cmpf oge, %76, %105 : vector<8x128xf32>
    %cst_45 = arith.constant 0.000000e+00 : f32
    %107 = vector.broadcast %cst_45 : f32 to vector<8x128xf32>
    %108 = arith.subf %107, %104 : vector<8x128xf32>
    %109 = arith.select %106, %104, %108 : vector<8x128xi1>, vector<8x128xf32>
    %cst_46 = arith.constant 1.000000e+00 : f32
    %110 = vector.broadcast %cst_46 : f32 to vector<8x128xf32>
    %111 = arith.addf %110, %109 : vector<8x128xf32>
    %112 = arith.mulf %74, %111 : vector<8x128xf32>
    %c1_47 = arith.constant 1 : index
    %c0_48 = arith.constant 0 : index
    %113 = vector.load %arg4[%c1_47, %c0_48] : memref<3x128xf32, #tpu.memory_space<vmem>>, vector<1x128xf32>
    %114 = vector.broadcast %113 : vector<1x128xf32> to vector<8x128xf32>
    %115 = arith.mulf %112, %114 : vector<8x128xf32>
    %cst_49 = arith.constant dense<0.000000e+00> : vector<8xf32>
    %116 = vector.multi_reduction <add>, %115, %cst_49 [1] : vector<8x128xf32> to vector<8xf32>
    %117 = vector.shape_cast %116 : vector<8xf32> to vector<8x1xf32>
    %c2 = arith.constant 2 : index
    %c0_50 = arith.constant 0 : index
    %118 = vector.load %arg4[%c2, %c0_50] : memref<3x128xf32, #tpu.memory_space<vmem>>, vector<1x1xf32>
    %119 = vector.extract %118[0, 0] : f32 from vector<1x1xf32>
    %120 = vector.broadcast %119 : f32 to vector<8x1xf32>
    %121 = arith.addf %117, %120 : vector<8x1xf32>
    %122 = arith.negf %121 : vector<8x1xf32>
    %123 = math.exp %122 : vector<8x1xf32>
    %cst_51 = arith.constant 1.000000e+00 : f32
    %124 = vector.broadcast %cst_51 : f32 to vector<8x1xf32>
    %125 = arith.addf %124, %123 : vector<8x1xf32>
    %126 = arith.divf %124, %125 : vector<8x1xf32>
    %127 = tpu.iota {dimensions = array<i32: 1>} : vector<8x128xi32>
    %c48_i32 = arith.constant 48 : i32
    %128 = vector.broadcast %c48_i32 : i32 to vector<8x128xi32>
    %129 = arith.cmpi eq, %127, %128 : vector<8x128xi32>
    %130 = vector.shape_cast %126 : vector<8x1xf32> to vector<8x1xf32>
    %131 = vector.broadcast %130 : vector<8x1xf32> to vector<8x128xf32>
    %132 = arith.select %129, %131, %72 : vector<8x128xi1>, vector<8x128xf32>
    %c0_52 = arith.constant 0 : index
    %c0_53 = arith.constant 0 : index
    %133 = vector.load %arg5[%c0_52, %c0_53] : memref<8x128xf32, #tpu.memory_space<vmem>>, vector<8x128xf32>
    tpu.vector_store %arg5[%c0_52, %c0_53], %132 {strides = array<i32>} : memref<8x128xf32, #tpu.memory_space<vmem>>, vector<8x128xf32>,
    return
  }
}

</mosaic_0001>

<llo_original>
// kernel: tpu_custom_call.1
$region0: #{tpu_custom_call.1}
  #allocation0 [shape = 'u32[]', space=smem, size = 0x4, offset = 0x4, fixed_abs, tag = 'smem constant byte address 0x4 - core index']
  #allocation1 [shape = 'u32[144,128]{1,0:T(1,128)}', space=vmem, size = 0x12000, scoped, tag = 'internal scratch']
  %s0 = inlined_call_operand.hbm [shape: f32[8,32], index: 0, kind: input, shape index: {}]
  %s1 = inlined_call_operand.hbm [shape: f32[32,32], index: 1, kind: input, shape index: {}]
  %s2 = inlined_call_operand.hbm [shape: f32[32,128], index: 2, kind: input, shape index: {}]
  %s3 = inlined_call_operand.vmem [shape: f32[2,32], index: 3, kind: input, shape index: {}]
  %s4 = inlined_call_operand.vmem [shape: f32[3,128], index: 4, kind: input, shape index: {}]
  %s5 = inlined_call_operand.hbm [shape: f32[8,128], index: 5, kind: output, shape index: {}]
  %s6 = sld [smem:[#allocation0]]
  $region42: #{tpu_custom_call.1} parent=0
    _
  %s8 = ssub.s32 1, %s6
  %s9 = scalar_select 0, %s8, %s6
  $region1: #{tpu_custom_call.1} parent=0
    #allocation2 [shape = 'u8[4096]{0}', space=vmem, size = 0x1000, scoped, tag = 'input window, operand 0, single buffered']
    #allocation3 [shape = 's32[1]{0}', space=sflag, size = 0x4, scoped, tag = 'scoped memory for tpu_custom_call.1']
    #allocation4 [shape = 's32[1]{0}', space=sflag, size = 0x4, scoped, tag = 'scoped memory for tpu_custom_call.1']
    #allocation5 [shape = 'u8[16384]{0}', space=vmem, size = 0x4000, scoped, tag = 'input window, operand 1, single buffered']
    #allocation6 [shape = 's32[1]{0}', space=sflag, size = 0x4, scoped, tag = 'scoped memory for tpu_custom_call.1']
    #allocation7 [shape = 'u8[16384]{0}', space=vmem, size = 0x4000, scoped, tag = 'input window, operand 2, single buffered']
    #allocation8 [shape = 'u8[4096]{0}', space=vmem, size = 0x1000, scoped, tag = 'output window, operand 0, single buffered']
    %10 = vsyncpa [#allocation3], 0
    %11 = vsyncpa [#allocation6], 0
    %12 = vsyncpa [#allocation4], 0
    // Predicated region
    $region2: #{tpu_custom_call.1} parent=1 // pred_check
      _
    $region3: #{tpu_custom_call.1} parent=1 // pred_check_branch
      %14 = sbr.rel (0) target = $region5
    $region4: #{tpu_custom_call.1} parent=1 // pred_region
      %s16 = ssub.s32 128, 128
      %17 = vsyncadd [#allocation3], %s16
      %s19 = sshll.u32 [#allocation2], 4
      %s20 = int_to_ptr.vmem [resolvable:$true] %s19
      %22 = dma.hbm_to_vmem [thread:$0]  %s0, 128, %s20, [#allocation3]
    $region5: #{tpu_custom_call.1} parent=1 // pred_fallthru
      _
    // Predicated region
    $region6: #{tpu_custom_call.1} parent=1 // pred_check
      _
    $region7: #{tpu_custom_call.1} parent=1 // pred_check_branch
      %24 = sbr.rel (0) target = $region9
    $region8: #{tpu_custom_call.1} parent=1 // pred_region
      %s26 = ssub.s32 512, 512
      %27 = vsyncadd [#allocation6], %s26
      %s28 = sshll.u32 [#allocation5], 4
      %s29 = int_to_ptr.vmem [resolvable:$true] %s28
      %34 = dma.hbm_to_vmem [thread:$0]  %s1, 512, %s29, [#allocation6], 128, 128, 8
    $region9: #{tpu_custom_call.1} parent=1 // pred_fallthru
      _
    // Predicated region
    $region10: #{tpu_custom_call.1} parent=1 // pred_check
      _
    $region11: #{tpu_custom_call.1} parent=1 // pred_check_branch
      %36 = sbr.rel (0) target = $region13
    $region12: #{tpu_custom_call.1} parent=1 // pred_region
      %s38 = ssub.s32 512, 512
      %39 = vsyncadd [#allocation6], %s38
      %s40 = sshll.u32 [#allocation7], 4
      %s41 = int_to_ptr.vmem [resolvable:$true] %s40
      %46 = dma.hbm_to_vmem [thread:$0]  %s2, 512, %s41, [#allocation6], 128, 128, 8
    $region13: #{tpu_custom_call.1} parent=1 // pred_fallthru
      _
    // Predicated region
    $region14: #{tpu_custom_call.1} parent=1 // pred_check
      _
    $region15: #{tpu_custom_call.1} parent=1 // pred_check_branch
      %48 = sbr.rel (0) target = $region17
    $region16: #{tpu_custom_call.1} parent=1 // pred_region
      _
    $region17: #{tpu_custom_call.1} parent=1 // pred_fallthru
      _
    // Predicated region
    $region18: #{tpu_custom_call.1} parent=1 // pred_check
      _
    $region19: #{tpu_custom_call.1} parent=1 // pred_check_branch
      %50 = sbr.rel (0) target = $region21
    $region20: #{tpu_custom_call.1} parent=1 // pred_region
      _
    $region21: #{tpu_custom_call.1} parent=1 // pred_fallthru
      _
    // Predicated region
    $region22: #{tpu_custom_call.1} parent=1 // pred_check
      _
    $region23: #{tpu_custom_call.1} parent=1 // pred_check_branch
      %52 = sbr.rel (0) target = $region25
    $region24: #{tpu_custom_call.1} parent=1 // pred_region
      %53 = dma.done [#allocation3], 128
    $region25: #{tpu_custom_call.1} parent=1 // pred_fallthru
      _
    // Predicated region
    $region26: #{tpu_custom_call.1} parent=1 // pred_check
      _
    $region27: #{tpu_custom_call.1} parent=1 // pred_check_branch
      %55 = sbr.rel (0) target = $region29
    $region28: #{tpu_custom_call.1} parent=1 // pred_region
      %56 = dma.done [#allocation6], 512
    $region29: #{tpu_custom_call.1} parent=1 // pred_fallthru
      _
    // Predicated region
    $region30: #{tpu_custom_call.1} parent=1 // pred_check
      _
    $region31: #{tpu_custom_call.1} parent=1 // pred_check_branch
      %58 = sbr.rel (0) target = $region33
    $region32: #{tpu_custom_call.1} parent=1 // pred_region
      %59 = dma.done [#allocation6], 512
    $region33: #{tpu_custom_call.1} parent=1 // pred_fallthru
      _
    %v60 = vld [vmem:[#allocation2] sm:$0xff]
    %v61 = vld [vmem:[#allocation5] sm:$0xff]
    %v62 = vld [vmem:[#allocation5 + $0x8] sm:$0xff]
    %v63 = vld [vmem:[#allocation5 + $0x10] sm:$0xff]
    %v64 = vld [vmem:[#allocation5 + $0x18] sm:$0xff]
    %vm65 = vcmask 261120
    %v67 = vsel %vm65, %v60, 0
    %69 = vmatprep.subr.mxu0 0.0
    %70 = vmatpush1.msra.mxu0 %v61
    %71 = vmatprep.subr.mxu0 0.0
    %72 = vmatpush1.msra.mxu0 %v62
    %73 = vmatprep.subr.mxu0 0.0
    %74 = vmatpush1.msra.mxu0 %v63
    %75 = vmatprep.subr.mxu0 0.0
    %76 = vmatpush1.msra.mxu0 %v64
    %77 = vmatprep.subr.mxu0 0.0
    %78 = vmatpush1.msra.mxu0 0.0
    %79 = vmatprep.subr.mxu0 0.0
    %80 = vmatpush1.msra.mxu0 0.0
    %81 = vmatprep.subr.mxu0 0.0
    %82 = vmatpush1.msra.mxu0 0.0
    %83 = vmatprep.subr.mxu0 0.0
    %84 = vmatpush1.msra.mxu0 0.0
    %85 = vmatprep.subr.mxu0 0.0
    %86 = vmatpush1.msra.mxu0 0.0
    %87 = vmatprep.subr.mxu0 0.0
    %88 = vmatpush1.msra.mxu0 0.0
    %89 = vmatprep.subr.mxu0 0.0
    %90 = vmatpush1.msra.mxu0 0.0
    %91 = vmatprep.subr.mxu0 0.0
    %92 = vmatpush1.msra.mxu0 0.0
    %93 = vmatprep.subr.mxu0 0.0
    %94 = vmatpush1.msra.mxu0 0.0
    %95 = vmatprep.subr.mxu0 0.0
    %96 = vmatpush1.msra.mxu0 0.0
    %97 = vmatprep.subr.mxu0 0.0
    %98 = vmatpush1.msra.mxu0 0.0
    %99 = vmatprep.subr.mxu0 0.0
    %100 = vmatpush1.msra.mxu0 0.0
    %101 = vmatprep.subr.mxu0 0.0
    %102 = vmatpush1.msra.mxu0 0.0
    %103 = vmatprep.subr.mxu0 0.0
    %104 = vmatpush1.msra.mxu0 0.0
    %105 = vmatprep.subr.mxu0 0.0
    %106 = vmatpush1.msra.mxu0 0.0
    %107 = vmatprep.subr.mxu0 0.0
    %108 = vmatpush1.msra.mxu0 0.0
    %109 = vmatprep.subr.mxu0 0.0
    %110 = vmatpush1.msra.mxu0 0.0
    %111 = vmatprep.subr.mxu0 0.0
    %112 = vmatpush1.msra.mxu0 0.0
    %113 = vmatprep.subr.mxu0 0.0
    %114 = vmatpush1.msra.mxu0 0.0
    %115 = vmatprep.subr.mxu0 0.0
    %116 = vmatpush1.msra.mxu0 0.0
    %117 = vmatprep.subr.mxu0 0.0
    %118 = vmatpush1.msra.mxu0 0.0
    %119 = vmatprep.subr.mxu0 0.0
    %120 = vmatpush1.msra.mxu0 0.0
    %121 = vmatprep.subr.mxu0 0.0
    %122 = vmatpush1.msra.mxu0 0.0
    %123 = vmatprep.subr.mxu0 0.0
    %124 = vmatpush1.msra.mxu0 0.0
    %125 = vmatprep.subr.mxu0 0.0
    %126 = vmatpush1.msra.mxu0 0.0
    %127 = vmatprep.subr.mxu0 0.0
    %128 = vmatpush1.msra.mxu0 0.0
    %129 = vmatprep.subr.mxu0 0.0
    %130 = vmatpush1.msra.mxu0 0.0
    %131 = vmatprep.subr.mxu0 0.0
    %132 = vmatpush1.msra.mxu0 0.0
    %133 = vmatprep.mubr.f32.mxu0 0.0
    %134 = vmatmul.mubr.f32.gmra.mrb[0].mxu0 %v67
    %v135 = vpop.f32.mrb[0].mxu0
    %v136 = vadd.f32 0.0, %v135
    %v137 = vpop.f32.mrb[0].mxu0
    %138 = vdwg.mxu0
    %v139 = vsel %vm65, %v136, 0.0
    %v140 = vrot.slane %v139, 4
    %v141 = vadd.f32 %v139, %v140
    %v142 = vrot.slane %v141, 2
    %v143 = vadd.f32 %v141, %v142
    %v144 = vrot.slane %v143, 1
    %v145 = vadd.f32 %v143, %v144
    %v146 = vmul.f32 %v145, 0.125
    %v147 = vmul.f32 %v136, %v136
    %v148 = vsel %vm65, %v147, 0.0
    %v149 = vrot.slane %v148, 4
    %v150 = vadd.f32 %v148, %v149
    %v151 = vrot.slane %v150, 2
    %v152 = vadd.f32 %v150, %v151
    %v153 = vrot.slane %v152, 1
    %v154 = vadd.f32 %v152, %v153
    %v155 = vmul.f32 %v154, 0.125
    %v156 = vmul.f32 %v146, %v146
    %v157 = vsub.f32 %v155, %v156
    %v158 = vmax.f32 %v157, 0.0
    %v159 = vld [vmem:[%s3] sm:$0x1]
    %v160 = vadd.f32 %v158, 0.001
    %v161 = vrsqrt.pop %v160
    %v162 = vmul.f32 %v159, %v161
    %v163 = vld [vmem:[%s3 + $0x1] sm:$0x1]
    %v164 = vmul.f32 %v146, %v162
    %v165 = vsub.f32 %v163, %v164
    %v166 = vlaneseq
    %v167 = vshrl.u32 %v166, 7
    %v168 = vsub.s32 0, %v167
    %v169 = vrot.slane %v162, %v168
    %v170 = vmul.f32 %v136, %v169
    %v171 = vlaneseq
    %v172 = vshrl.u32 %v171, 7
    %v173 = vsub.s32 0, %v172
    %v174 = vrot.slane %v165, %v173
    %v175 = vadd.f32 %v170, %v174
    %v176 = vmul.f32 %v175, 0.5
    %v177 = vmul.f32 %v175, 0.70710677
    %v178 = vand.u32 2147483647, %v177
    %v179 = vmul.f32 %v178, 0.3275911
    %v180 = vadd.f32 %v179, 1.0
    %v181 = vrcp.pop %v180
    %v182 = vmul.f32 1.0, %v181
    %v183 = vmul.f32 %v182, 1.0614054
    %v184 = vadd.f32 %v183, -1.4531521
    %v185 = vmul.f32 %v184, %v182
    %v186 = vadd.f32 %v185, 1.4214138
    %v187 = vmul.f32 %v186, %v182
    %v188 = vadd.f32 %v187, -0.28449672
    %v189 = vmul.f32 %v188, %v182
    %v190 = vadd.f32 %v189, 0.2548296
    %v191 = vmul.f32 %v190, %v182
    %v192 = vsub.f32 0.0, %v178
    %v193 = vmul.f32 %v192, %v178
    %v194 = vmul.f32 %v193, 1.442695
    %v195 = vpow.pop %v194
    %v196 = vmul.f32 %v191, %v195
    %v197 = vsub.f32 1.0, %v196
    %vm198 = vcmp.ge.f32.partialorder %v177, 0.0
    %v199 = vsub.f32 0.0, %v197
    %v200 = vsel %vm198, %v197, %v199
    %v201 = vadd.f32 %v200, 1.0
    %v202 = vmul.f32 %v176, %v201
    %v203 = vld [vmem:[#allocation7] sm:$0xff]
    %v204 = vld [vmem:[#allocation7 + $0x8] sm:$0xff]
    %v205 = vld [vmem:[#allocation7 + $0x10] sm:$0xff]
    %v206 = vld [vmem:[#allocation7 + $0x18] sm:$0xff]
    %v207 = vld [vmem:[%s4] sm:$0x1]
    %v208 = vlaneseq
    %v209 = vshrl.u32 %v208, 7
    %v210 = vsub.s32 0, %v209
    %v211 = vrot.slane %v207, %v210
    %v213 = vsel %vm65, %v202, 0
    %215 = vmatprep.subr.mxu0 0.0
    %216 = vmatpush1.msra.mxu0 %v203
    %217 = vmatprep.subr.mxu0 0.0
    %218 = vmatpush1.msra.mxu0 %v204
    %219 = vmatprep.subr.mxu0 0.0
    %220 = vmatpush1.msra.mxu0 %v205
    %221 = vmatprep.subr.mxu0 0.0
    %222 = vmatpush1.msra.mxu0 %v206
    %223 = vmatprep.subr.mxu0 0.0
    %224 = vmatpush1.msra.mxu0 0.0
    %225 = vmatprep.subr.mxu0 0.0
    %226 = vmatpush1.msra.mxu0 0.0
    %227 = vmatprep.subr.mxu0 0.0
    %228 = vmatpush1.msra.mxu0 0.0
    %229 = vmatprep.subr.mxu0 0.0
    %230 = vmatpush1.msra.mxu0 0.0
    %231 = vmatprep.subr.mxu0 0.0
    %232 = vmatpush1.msra.mxu0 0.0
    %233 = vmatprep.subr.mxu0 0.0
    %234 = vmatpush1.msra.mxu0 0.0
    %235 = vmatprep.subr.mxu0 0.0
    %236 = vmatpush1.msra.mxu0 0.0
    %237 = vmatprep.subr.mxu0 0.0
    %238 = vmatpush1.msra.mxu0 0.0
    %239 = vmatprep.subr.mxu0 0.0
    %240 = vmatpush1.msra.mxu0 0.0
    %241 = vmatprep.subr.mxu0 0.0
    %242 = vmatpush1.msra.mxu0 0.0
    %243 = vmatprep.subr.mxu0 0.0
    %244 = vmatpush1.msra.mxu0 0.0
    %245 = vmatprep.subr.mxu0 0.0
    %246 = vmatpush1.msra.mxu0 0.0
    %247 = vmatprep.subr.mxu0 0.0
    %248 = vmatpush1.msra.mxu0 0.0
    %249 = vmatprep.subr.mxu0 0.0
    %250 = vmatpush1.msra.mxu0 0.0
    %251 = vmatprep.subr.mxu0 0.0
    %252 = vmatpush1.msra.mxu0 0.0
    %253 = vmatprep.subr.mxu0 0.0
    %254 = vmatpush1.msra.mxu0 0.0
    %255 = vmatprep.subr.mxu0 0.0
    %256 = vmatpush1.msra.mxu0 0.0
    %257 = vmatprep.subr.mxu0 0.0
    %258 = vmatpush1.msra.mxu0 0.0
    %259 = vmatprep.subr.mxu0 0.0
    %260 = vmatpush1.msra.mxu0 0.0
    %261 = vmatprep.subr.mxu0 0.0
    %262 = vmatpush1.msra.mxu0 0.0
    %263 = vmatprep.subr.mxu0 0.0
    %264 = vmatpush1.msra.mxu0 0.0
    %265 = vmatprep.subr.mxu0 0.0
    %266 = vmatpush1.msra.mxu0 0.0
    %267 = vmatprep.subr.mxu0 0.0
    %268 = vmatpush1.msra.mxu0 0.0
    %269 = vmatprep.subr.mxu0 0.0
    %270 = vmatpush1.msra.mxu0 0.0
    %271 = vmatprep.subr.mxu0 0.0
    %272 = vmatpush1.msra.mxu0 0.0
    %273 = vmatprep.subr.mxu0 0.0
    %274 = vmatpush1.msra.mxu0 0.0
    %275 = vmatprep.subr.mxu0 0.0
    %276 = vmatpush1.msra.mxu0 0.0
    %277 = vmatprep.subr.mxu0 0.0
    %278 = vmatpush1.msra.mxu0 0.0
    %279 = vmatprep.mubr.f32.mxu0 0.0
    %280 = vmatmul.mubr.f32.gmra.mrb[0].mxu0 %v213
    %v281 = vpop.f32.mrb[0].mxu0
    %v282 = vadd.f32 %v211, %v281
    %v283 = vpop.f32.mrb[0].mxu0
    %284 = vdwg.mxu0
    %v285 = vmul.f32 %v282, 0.5
    %v286 = vmul.f32 %v282, 0.70710677
    %v287 = vand.u32 2147483647, %v286
    %v288 = vmul.f32 %v287, 0.3275911
    %v289 = vadd.f32 %v288, 1.0
    %v290 = vrcp.pop %v289
    %v291 = vmul.f32 1.0, %v290
    %v292 = vmul.f32 %v291, 1.0614054
    %v293 = vadd.f32 %v292, -1.4531521
    %v294 = vmul.f32 %v293, %v291
    %v295 = vadd.f32 %v294, 1.4214138
    %v296 = vmul.f32 %v295, %v291
    %v297 = vadd.f32 %v296, -0.28449672
    %v298 = vmul.f32 %v297, %v291
    %v299 = vadd.f32 %v298, 0.2548296
    %v300 = vmul.f32 %v299, %v291
    %v301 = vsub.f32 0.0, %v287
    %v302 = vmul.f32 %v301, %v287
    %v303 = vmul.f32 %v302, 1.442695
    %v304 = vpow.pop %v303
    %v305 = vmul.f32 %v300, %v304
    %v306 = vsub.f32 1.0, %v305
    %vm307 = vcmp.ge.f32.partialorder %v286, 0.0
    %v308 = vsub.f32 0.0, %v306
    %v309 = vsel %vm307, %v306, %v308
    %v310 = vadd.f32 %v309, 1.0
    %v311 = vmul.f32 %v285, %v310
    %v312 = vld [vmem:[%s4 + $0x1] sm:$0x1]
    %v313 = vlaneseq
    %v314 = vshrl.u32 %v313, 7
    %v315 = vsub.s32 0, %v314
    %v316 = vrot.slane %v312, %v315
    %v317 = vmul.f32 %v311, %v316
    %318 = vadd.xlane.f32.xlu0 %v317
    %v319 = vpop.xlane.xlu0 %318
    %v320 = vld [vmem:[%s4 + $0x2] sm:$0x1]
    %s321 = vtos %v320
    %v322 = vstv %s321
    %v323 = vadd.f32 %v319, %v322
    %v324 = vxor.u32 %v323, 2147483648
    %v325 = vmul.f32 %v324, 1.442695
    %v326 = vpow.pop %v325
    %v327 = vadd.f32 %v326, 1.0
    %v328 = vrcp.pop %v327
    %v329 = vmul.f32 1.0, %v328
    %v330 = vlaneseq
    %v331 = vand.u32 %v330, 127
    %vm332 = vcmp.eq.s32.totalorder %v331, 48
    %v333 = vsel %vm332, %v329, %v282
    %334 = vst [vmem:[#allocation8] sm:$0xff] %v333
    // Predicated region
    $region34: #{tpu_custom_call.1} parent=1 // pred_check
      _
    $region35: #{tpu_custom_call.1} parent=1 // pred_check_branch
      %336 = sbr.rel (0) target = $region37
    $region36: #{tpu_custom_call.1} parent=1 // pred_region
      %s338 = ssub.s32 128, 128
      %339 = vsyncadd [#allocation4], %s338
      %s341 = sshll.u32 [#allocation8], 4
      %s342 = int_to_ptr.vmem [resolvable:$true] %s341
      %344 = dma.vmem_to_hbm [thread:$0]  %s342, 128, %s5, [#allocation4]
    $region37: #{tpu_custom_call.1} parent=1 // pred_fallthru
      _
    // Predicated region
    $region38: #{tpu_custom_call.1} parent=1 // pred_check
      _
    $region39: #{tpu_custom_call.1} parent=1 // pred_check_branch
      %346 = sbr.rel (0) target = $region41
    $region40: #{tpu_custom_call.1} parent=1 // pred_region
      %347 = dma.done [#allocation4], 128
    $region41: #{tpu_custom_call.1} parent=1 // pred_fallthru
      _
    %348 = vsyncpa [#allocation3], 1
    %349 = vsyncpa [#allocation6], 1
    %350 = vsyncpa [#allocation4], 1

</llo_original>
